<compile_context>
chip_gen: v5e
topology: v5e:2x2
jax: 0.10.0
libtpu: 0.0.40
codegen_flags: <defaults>
</compile_context>

<pallas_src>
import functools

import numpy as np
import jax
import jax.numpy as jnp
from jax.experimental import pallas as pl
from jax.experimental.pallas import tpu as pltpu


def _round_up(x, m):
    return (x + m - 1) // m * m


def _euler_schedule(n_timesteps):
    """(t, dt) per Euler step, replicating BASECFM.solve_euler's f32 accumulation."""
    t_span = np.linspace(0.0, 1.0, n_timesteps + 1, dtype=np.float32)
    t = np.float32(t_span[0])
    dt = np.float32(t_span[1] - t_span[0])
    ts, dts = [], []
    for step in range(1, n_timesteps + 1):
        ts.append(float(t))
        dts.append(float(dt))
        t = np.float32(t + dt)
        if step < n_timesteps:
            dt = np.float32(t_span[step + 1] - t)
    return tuple(ts), tuple(dts)


def _choose_tile_t(t_pad, n_feats, batch):
    """Largest 128-multiple tile that keeps ~3 live (F, tile) f32 arrays in vregs."""
    budget = (192 * 1024) // (12 * n_feats)   # bytes budget / (3 arrays * 4B * F)
    tile = 128
    for cand in (512, 256):
        if cand <= budget and t_pad % cand == 0:
            tile = cand
            break
    # v7x has 2 TensorCores: make sure the "parallel" grid has >= 2 tiles.
    while batch * (t_pad // tile) < 2 and tile > 128:
        tile //= 2
    return tile


# TODO(synk): BASECFM.estimator is abstract (None) in the reference module; the
# linear-tanh estimator below is a deterministic stand-in with the same signature.
def _cfm_euler_kernel(ts, dts,
                      z_ref, mu_ref, mask_ref, condb_ref, w1_ref, w2_ref, wt_ref,
                      out_ref):
    mask = mask_ref[...]            # (1, tile_t); broadcasts over feats in the update
    wt = wt_ref[...]                # (F, 1)
    w1 = w1_ref[...]                # (F, F), loaded once before the loop

    # Loop-invariant conditioning: one MXU matmul + per-batch speaker/bias column.
    cond = (jnp.dot(w2_ref[...], mu_ref[...], preferred_element_type=jnp.float32)
            + condb_ref[...])       # (F, tile_t), condb (F, 1) lane-broadcast

    # x stays in vregs through the fully unrolled integration; single store at end.
    x = z_ref[...]                  # (F, tile_t) f32
    for t, dt in zip(ts, dts):      # static trip count -> unrolled
        h = jnp.dot(w1, x, preferred_element_type=jnp.float32) + cond + wt * t
        x = x + jnp.tanh(h) * (mask * dt)   # dt folded into the (1, tile_t) mask row
    out_ref[...] = x


def cfm_forward(mu, mask, n_timesteps, params, *, temperature=1.0,
                spks=None, noise_key=None):
    """Pallas implementation of BASECFM.forward (Euler ODE solve), f32 throughout."""
    B, F, T = mu.shape
    W1, W2, Wspk, wt, b = params
    SPK = Wspk.shape[1]

    if noise_key is None:
        noise_key = jax.random.PRNGKey(0)
    # TODO(synk): z could be generated in-kernel (pltpu.prng_*) to save one HBM
    # round trip, but the caller/reference check needs z returned, so keep it here.
    z = jax.random.normal(noise_key, (B, F, T), dtype=jnp.float32) * temperature
    if spks is None:
        spks = jnp.zeros((B, SPK), dtype=jnp.float32)

    # Hoisted loop-invariant speaker projection + bias, per batch: (B, F, 1).
    condb = (jnp.einsum('fs,bs->bf', Wspk, spks) + b[:, 0][None, :])[:, :, None]

    # Native (B, F, T) layout; pad time axis to a multiple of 128 lanes only.
    T_pad = _round_up(T, 128)
    tile_t = _choose_tile_t(T_pad, F, B)

    mask_f = mask.astype(jnp.float32)
    if T_pad != T:
        pad = ((0, 0), (0, 0), (0, T_pad - T))
        z_p = jnp.pad(z, pad)
        mu_p = jnp.pad(mu, pad)
        mask_p = jnp.pad(mask_f, pad)   # zero mask in padded lanes -> dphi/dt = 0 there
    else:
        z_p, mu_p, mask_p = z, mu, mask_f

    ts, dts = _euler_schedule(n_timesteps)
    kernel = functools.partial(_cfm_euler_kernel, ts, dts)

    out_p = pl.pallas_call(
        kernel,
        out_shape=jax.ShapeDtypeStruct((B, F, T_pad), jnp.float32),
        grid=(B, T_pad // tile_t),
        in_specs=[
            pl.BlockSpec((None, F, tile_t), lambda b_, t_: (b_, 0, t_)),   # z
            pl.BlockSpec((None, F, tile_t), lambda b_, t_: (b_, 0, t_)),   # mu
            pl.BlockSpec((None, 1, tile_t), lambda b_, t_: (b_, 0, t_)),   # mask
            pl.BlockSpec((None, F, 1),      lambda b_, t_: (b_, 0, 0)),    # spk proj + bias
            pl.BlockSpec((F, F),            lambda b_, t_: (0, 0)),        # W1
            pl.BlockSpec((F, F),            lambda b_, t_: (0, 0)),        # W2
            pl.BlockSpec((F, 1),            lambda b_, t_: (0, 0)),        # w_t
        ],
        out_specs=pl.BlockSpec((None, F, tile_t), lambda b_, t_: (b_, 0, t_)),
        compiler_params=pltpu.CompilerParams(
            dimension_semantics=("parallel", "parallel")),
    )(z_p, mu_p, mask_p, condb, W1, W2, wt)

    out = out_p[:, :, :T] if T_pad != T else out_p
    return out, z


def cfm_forward_ref(z, mu, mask, spks, n_timesteps, params):
    """Pure-JAX reference mirroring BASECFM.solve_euler with the same estimator."""
    W1, W2, Wspk, wt, b = params
    ts, dts = _euler_schedule(n_timesteps)
    spk_proj = jnp.einsum('fs,bs->bf', Wspk, spks)[:, :, None]
    x = z
    for t, dt in zip(ts, dts):
        h = (jnp.einsum('fg,bgt->bft', W1, x)
             + jnp.einsum('fg,bgt->bft', W2, mu)
             + spk_proj + wt[None] * t + b[None])
        x = x + dt * (jnp.tanh(h) * mask)
    return x


if __name__ == "__main__":
    B, F, T, SPK = 2, 32, 64, 128
    n_timesteps = 8

    key = jax.random.PRNGKey(0)
    k_mu, k_w1, k_w2, k_ws, k_wt, k_b, k_spk, k_noise = jax.random.split(key, 8)

    mu = jax.random.normal(k_mu, (B, F, T), dtype=jnp.float32)
    # mask: last quarter of the mel frames masked out
    mask = jnp.concatenate(
        [jnp.ones((B, 1, 3 * T // 4), jnp.float32),
         jnp.zeros((B, 1, T - 3 * T // 4), jnp.float32)], axis=-1)
    spks = jax.random.normal(k_spk, (B, SPK), dtype=jnp.float32)

    scale = 0.1
    params = (
        scale * jax.random.normal(k_w1, (F, F), dtype=jnp.float32),     # W1
        scale * jax.random.normal(k_w2, (F, F), dtype=jnp.float32),     # W2
        scale * jax.random.normal(k_ws, (F, SPK), dtype=jnp.float32),   # Wspk
        scale * jax.random.normal(k_wt, (F, 1), dtype=jnp.float32),     # w_t
        scale * jax.random.normal(k_b, (F, 1), dtype=jnp.float32),      # bias
    )

    out, z = cfm_forward(mu, mask, n_timesteps, params,
                         temperature=1.0, spks=spks, noise_key=k_noise)
    out = jax.block_until_ready(out)

    ref = jax.block_until_ready(
        cfm_forward_ref(z, mu, mask, spks, n_timesteps, params))
    assert out.shape == (B, F, T)
    assert bool(jnp.allclose(out, ref, rtol=1e-3, atol=1e-3)), \
        f"max abs err {float(jnp.max(jnp.abs(out - ref)))}"

    print("KERNEL_OK")
</pallas_src>

<mosaic_0001>
module attributes {stable_mosaic.version = 11 : i64} {
  func.func @_cfm_euler_kernel(%arg0: i32, %arg1: i32, %arg2: memref<1x32x128xf32, #tpu.memory_space<vmem>>, %arg3: memref<1x32x128xf32, #tpu.memory_space<vmem>>, %arg4: memref<1x1x128xf32, #tpu.memory_space<vmem>>, %arg5: memref<1x32x1xf32, #tpu.memory_space<vmem>>, %arg6: memref<32x32xf32, #tpu.memory_space<vmem>>, %arg7: memref<32x32xf32, #tpu.memory_space<vmem>>, %arg8: memref<32x1xf32, #tpu.memory_space<vmem>>, %arg9: memref<1x32x128xf32, #tpu.memory_space<vmem>>) attributes {dimension_semantics = [#tpu.dimension_semantics<parallel>, #tpu.dimension_semantics<parallel>], iteration_bounds = array<i64: 2, 1>, scalar_prefetch = 0 : i64, scratch_operands = 0 : i64, tpu.core_type = #tpu.core_type<tc>, window_params = [{transform_indices = @transform_0, window_bounds = array<i64: 1, 32, 128>}, {transform_indices = @transform_1, window_bounds = array<i64: 1, 32, 128>}, {transform_indices = @transform_2, window_bounds = array<i64: 1, 1, 128>}, {transform_indices = @transform_3, window_bounds = array<i64: 1, 32, 1>}, {pipeline_mode = #tpu.pipeline_mode<synchronous>, transform_indices = @transform_4, window_bounds = array<i64: 32, 32>}, {pipeline_mode = #tpu.pipeline_mode<synchronous>, transform_indices = @transform_5, window_bounds = array<i64: 32, 32>}, {pipeline_mode = #tpu.pipeline_mode<synchronous>, transform_indices = @transform_6, window_bounds = array<i64: 32, 1>}, {transform_indices = @transform_7, window_bounds = array<i64: 1, 32, 128>}]} {
    %c0 = arith.constant 0 : index
    %c0_0 = arith.constant 0 : index
    %c0_1 = arith.constant 0 : index
    %0 = vector.load %arg4[%c0, %c0_0, %c0_1] : memref<1x1x128xf32, #tpu.memory_space<vmem>>, vector<1x1x128xf32>
    %1 = vector.shape_cast %0 : vector<1x1x128xf32> to vector<1x128xf32>
    %c0_2 = arith.constant 0 : index
    %c0_3 = arith.constant 0 : index
    %2 = vector.load %arg8[%c0_2, %c0_3] : memref<32x1xf32, #tpu.memory_space<vmem>>, vector<32x1xf32>
    %c0_4 = arith.constant 0 : index
    %c0_5 = arith.constant 0 : index
    %3 = vector.load %arg6[%c0_4, %c0_5] : memref<32x32xf32, #tpu.memory_space<vmem>>, vector<32x32xf32>
    %c0_6 = arith.constant 0 : index
    %c0_7 = arith.constant 0 : index
    %4 = vector.load %arg7[%c0_6, %c0_7] : memref<32x32xf32, #tpu.memory_space<vmem>>, vector<32x32xf32>
    %c0_8 = arith.constant 0 : index
    %c0_9 = arith.constant 0 : index
    %c0_10 = arith.constant 0 : index
    %5 = vector.load %arg3[%c0_8, %c0_9, %c0_10] : memref<1x32x128xf32, #tpu.memory_space<vmem>>, vector<1x32x128xf32>
    %6 = vector.shape_cast %5 : vector<1x32x128xf32> to vector<32x128xf32>
    %cst = arith.constant dense<0.000000e+00> : vector<32x128xf32>
    %7 = tpu.matmul %4, %6, %cst {dimension_numbers = #tpu.dot_dimension_numbers<[1], [0], [0], [1], [0, 0, 1, 1], [], []>} : vector<32x32xf32>, vector<32x128xf32>, vector<32x128xf32> -> vector<32x128xf32>
    %c0_11 = arith.constant 0 : index
    %c0_12 = arith.constant 0 : index
    %c0_13 = arith.constant 0 : index
    %8 = vector.load %arg5[%c0_11, %c0_12, %c0_13] : memref<1x32x1xf32, #tpu.memory_space<vmem>>, vector<1x32x1xf32>
    %9 = vector.shape_cast %8 : vector<1x32x1xf32> to vector<32x1xf32>
    %10 = vector.broadcast %9 : vector<32x1xf32> to vector<32x128xf32>
    %11 = arith.addf %7, %10 : vector<32x128xf32>
    %c0_14 = arith.constant 0 : index
    %c0_15 = arith.constant 0 : index
    %c0_16 = arith.constant 0 : index
    %12 = vector.load %arg2[%c0_14, %c0_15, %c0_16] : memref<1x32x128xf32, #tpu.memory_space<vmem>>, vector<1x32x128xf32>
    %13 = vector.shape_cast %12 : vector<1x32x128xf32> to vector<32x128xf32>
    %cst_17 = arith.constant dense<0.000000e+00> : vector<32x128xf32>
    %14 = tpu.matmul %3, %13, %cst_17 {dimension_numbers = #tpu.dot_dimension_numbers<[1], [0], [0], [1], [0, 0, 1, 1], [], []>} : vector<32x32xf32>, vector<32x128xf32>, vector<32x128xf32> -> vector<32x128xf32>
    %15 = arith.addf %14, %11 : vector<32x128xf32>
    %cst_18 = arith.constant 0.000000e+00 : f32
    %16 = vector.broadcast %cst_18 : f32 to vector<32x1xf32>
    %17 = arith.mulf %2, %16 : vector<32x1xf32>
    %18 = vector.broadcast %17 : vector<32x1xf32> to vector<32x128xf32>
    %19 = arith.addf %15, %18 : vector<32x128xf32>
    %20 = math.tanh %19 : vector<32x128xf32>
    %cst_19 = arith.constant 1.250000e-01 : f32
    %21 = vector.broadcast %cst_19 : f32 to vector<1x128xf32>
    %22 = arith.mulf %1, %21 : vector<1x128xf32>
    %23 = vector.broadcast %22 : vector<1x128xf32> to vector<32x128xf32>
    %24 = arith.mulf %20, %23 : vector<32x128xf32>
    %25 = arith.addf %13, %24 : vector<32x128xf32>
    %cst_20 = arith.constant dense<0.000000e+00> : vector<32x128xf32>
    %26 = tpu.matmul %3, %25, %cst_20 {dimension_numbers = #tpu.dot_dimension_numbers<[1], [0], [0], [1], [0, 0, 1, 1], [], []>} : vector<32x32xf32>, vector<32x128xf32>, vector<32x128xf32> -> vector<32x128xf32>
    %27 = arith.addf %26, %11 : vector<32x128xf32>
    %cst_21 = arith.constant 1.250000e-01 : f32
    %28 = vector.broadcast %cst_21 : f32 to vector<32x1xf32>
    %29 = arith.mulf %2, %28 : vector<32x1xf32>
    %30 = vector.broadcast %29 : vector<32x1xf32> to vector<32x128xf32>
    %31 = arith.addf %27, %30 : vector<32x128xf32>
    %32 = math.tanh %31 : vector<32x128xf32>
    %cst_22 = arith.constant 1.250000e-01 : f32
    %33 = vector.broadcast %cst_22 : f32 to vector<1x128xf32>
    %34 = arith.mulf %1, %33 : vector<1x128xf32>
    %35 = vector.broadcast %34 : vector<1x128xf32> to vector<32x128xf32>
    %36 = arith.mulf %32, %35 : vector<32x128xf32>
    %37 = arith.addf %25, %36 : vector<32x128xf32>
    %cst_23 = arith.constant dense<0.000000e+00> : vector<32x128xf32>
    %38 = tpu.matmul %3, %37, %cst_23 {dimension_numbers = #tpu.dot_dimension_numbers<[1], [0], [0], [1], [0, 0, 1, 1], [], []>} : vector<32x32xf32>, vector<32x128xf32>, vector<32x128xf32> -> vector<32x128xf32>
    %39 = arith.addf %38, %11 : vector<32x128xf32>
    %cst_24 = arith.constant 2.500000e-01 : f32
    %40 = vector.broadcast %cst_24 : f32 to vector<32x1xf32>
    %41 = arith.mulf %2, %40 : vector<32x1xf32>
    %42 = vector.broadcast %41 : vector<32x1xf32> to vector<32x128xf32>
    %43 = arith.addf %39, %42 : vector<32x128xf32>
    %44 = math.tanh %43 : vector<32x128xf32>
    %cst_25 = arith.constant 1.250000e-01 : f32
    %45 = vector.broadcast %cst_25 : f32 to vector<1x128xf32>
    %46 = arith.mulf %1, %45 : vector<1x128xf32>
    %47 = vector.broadcast %46 : vector<1x128xf32> to vector<32x128xf32>
    %48 = arith.mulf %44, %47 : vector<32x128xf32>
    %49 = arith.addf %37, %48 : vector<32x128xf32>
    %cst_26 = arith.constant dense<0.000000e+00> : vector<32x128xf32>
    %50 = tpu.matmul %3, %49, %cst_26 {dimension_numbers = #tpu.dot_dimension_numbers<[1], [0], [0], [1], [0, 0, 1, 1], [], []>} : vector<32x32xf32>, vector<32x128xf32>, vector<32x128xf32> -> vector<32x128xf32>
    %51 = arith.addf %50, %11 : vector<32x128xf32>
    %cst_27 = arith.constant 3.750000e-01 : f32
    %52 = vector.broadcast %cst_27 : f32 to vector<32x1xf32>
    %53 = arith.mulf %2, %52 : vector<32x1xf32>
    %54 = vector.broadcast %53 : vector<32x1xf32> to vector<32x128xf32>
    %55 = arith.addf %51, %54 : vector<32x128xf32>
    %56 = math.tanh %55 : vector<32x128xf32>
    %cst_28 = arith.constant 1.250000e-01 : f32
    %57 = vector.broadcast %cst_28 : f32 to vector<1x128xf32>
    %58 = arith.mulf %1, %57 : vector<1x128xf32>
    %59 = vector.broadcast %58 : vector<1x128xf32> to vector<32x128xf32>
    %60 = arith.mulf %56, %59 : vector<32x128xf32>
    %61 = arith.addf %49, %60 : vector<32x128xf32>
    %cst_29 = arith.constant dense<0.000000e+00> : vector<32x128xf32>
    %62 = tpu.matmul %3, %61, %cst_29 {dimension_numbers = #tpu.dot_dimension_numbers<[1], [0], [0], [1], [0, 0, 1, 1], [], []>} : vector<32x32xf32>, vector<32x128xf32>, vector<32x128xf32> -> vector<32x128xf32>
    %63 = arith.addf %62, %11 : vector<32x128xf32>
    %cst_30 = arith.constant 5.000000e-01 : f32
    %64 = vector.broadcast %cst_30 : f32 to vector<32x1xf32>
    %65 = arith.mulf %2, %64 : vector<32x1xf32>
    %66 = vector.broadcast %65 : vector<32x1xf32> to vector<32x128xf32>
    %67 = arith.addf %63, %66 : vector<32x128xf32>
    %68 = math.tanh %67 : vector<32x128xf32>
    %cst_31 = arith.constant 1.250000e-01 : f32
    %69 = vector.broadcast %cst_31 : f32 to vector<1x128xf32>
    %70 = arith.mulf %1, %69 : vector<1x128xf32>
    %71 = vector.broadcast %70 : vector<1x128xf32> to vector<32x128xf32>
    %72 = arith.mulf %68, %71 : vector<32x128xf32>
    %73 = arith.addf %61, %72 : vector<32x128xf32>
    %cst_32 = arith.constant dense<0.000000e+00> : vector<32x128xf32>
    %74 = tpu.matmul %3, %73, %cst_32 {dimension_numbers = #tpu.dot_dimension_numbers<[1], [0], [0], [1], [0, 0, 1, 1], [], []>} : vector<32x32xf32>, vector<32x128xf32>, vector<32x128xf32> -> vector<32x128xf32>
    %75 = arith.addf %74, %11 : vector<32x128xf32>
    %cst_33 = arith.constant 6.250000e-01 : f32
    %76 = vector.broadcast %cst_33 : f32 to vector<32x1xf32>
    %77 = arith.mulf %2, %76 : vector<32x1xf32>
    %78 = vector.broadcast %77 : vector<32x1xf32> to vector<32x128xf32>
    %79 = arith.addf %75, %78 : vector<32x128xf32>
    %80 = math.tanh %79 : vector<32x128xf32>
    %cst_34 = arith.constant 1.250000e-01 : f32
    %81 = vector.broadcast %cst_34 : f32 to vector<1x128xf32>
    %82 = arith.mulf %1, %81 : vector<1x128xf32>
    %83 = vector.broadcast %82 : vector<1x128xf32> to vector<32x128xf32>
    %84 = arith.mulf %80, %83 : vector<32x128xf32>
    %85 = arith.addf %73, %84 : vector<32x128xf32>
    %cst_35 = arith.constant dense<0.000000e+00> : vector<32x128xf32>
    %86 = tpu.matmul %3, %85, %cst_35 {dimension_numbers = #tpu.dot_dimension_numbers<[1], [0], [0], [1], [0, 0, 1, 1], [], []>} : vector<32x32xf32>, vector<32x128xf32>, vector<32x128xf32> -> vector<32x128xf32>
    %87 = arith.addf %86, %11 : vector<32x128xf32>
    %cst_36 = arith.constant 7.500000e-01 : f32
    %88 = vector.broadcast %cst_36 : f32 to vector<32x1xf32>
    %89 = arith.mulf %2, %88 : vector<32x1xf32>
    %90 = vector.broadcast %89 : vector<32x1xf32> to vector<32x128xf32>
    %91 = arith.addf %87, %90 : vector<32x128xf32>
    %92 = math.tanh %91 : vector<32x128xf32>
    %cst_37 = arith.constant 1.250000e-01 : f32
    %93 = vector.broadcast %cst_37 : f32 to vector<1x128xf32>
    %94 = arith.mulf %1, %93 : vector<1x128xf32>
    %95 = vector.broadcast %94 : vector<1x128xf32> to vector<32x128xf32>
    %96 = arith.mulf %92, %95 : vector<32x128xf32>
    %97 = arith.addf %85, %96 : vector<32x128xf32>
    %cst_38 = arith.constant dense<0.000000e+00> : vector<32x128xf32>
    %98 = tpu.matmul %3, %97, %cst_38 {dimension_numbers = #tpu.dot_dimension_numbers<[1], [0], [0], [1], [0, 0, 1, 1], [], []>} : vector<32x32xf32>, vector<32x128xf32>, vector<32x128xf32> -> vector<32x128xf32>
    %99 = arith.addf %98, %11 : vector<32x128xf32>
    %cst_39 = arith.constant 8.750000e-01 : f32
    %100 = vector.broadcast %cst_39 : f32 to vector<32x1xf32>
    %101 = arith.mulf %2, %100 : vector<32x1xf32>
    %102 = vector.broadcast %101 : vector<32x1xf32> to vector<32x128xf32>
    %103 = arith.addf %99, %102 : vector<32x128xf32>
    %104 = math.tanh %103 : vector<32x128xf32>
    %cst_40 = arith.constant 1.250000e-01 : f32
    %105 = vector.broadcast %cst_40 : f32 to vector<1x128xf32>
    %106 = arith.mulf %1, %105 : vector<1x128xf32>
    %107 = vector.broadcast %106 : vector<1x128xf32> to vector<32x128xf32>
    %108 = arith.mulf %104, %107 : vector<32x128xf32>
    %109 = arith.addf %97, %108 : vector<32x128xf32>
    %c0_41 = arith.constant 0 : index
    %c0_42 = arith.constant 0 : index
    %c0_43 = arith.constant 0 : index
    %110 = vector.load %arg9[%c0_41, %c0_42, %c0_43] : memref<1x32x128xf32, #tpu.memory_space<vmem>>, vector<1x32x128xf32>
    %111 = vector.shape_cast %110 : vector<1x32x128xf32> to vector<32x128xf32>
    %112 = vector.shape_cast %109 : vector<32x128xf32> to vector<1x32x128xf32>
    tpu.vector_store %arg9[%c0_41, %c0_42, %c0_43], %112 {strides = array<i32>} : memref<1x32x128xf32, #tpu.memory_space<vmem>>, vector<1x32x128xf32>,
    return
  }
  func.func @transform_0(%arg0: i32, %arg1: i32) -> (i32, i32, i32) {
    %c0_i32 = arith.constant 0 : i32
    %c0_i32_0 = arith.constant 0 : i32
    return %arg0, %c0_i32, %arg1 : i32, i32, i32
  }
  func.func @transform_1(%arg0: i32, %arg1: i32) -> (i32, i32, i32) {
    %c0_i32 = arith.constant 0 : i32
    %c0_i32_0 = arith.constant 0 : i32
    return %arg0, %c0_i32, %arg1 : i32, i32, i32
  }
  func.func @transform_2(%arg0: i32, %arg1: i32) -> (i32, i32, i32) {
    %c0_i32 = arith.constant 0 : i32
    %c0_i32_0 = arith.constant 0 : i32
    return %arg0, %c0_i32, %arg1 : i32, i32, i32
  }
  func.func @transform_3(%arg0: i32, %arg1: i32) -> (i32, i32, i32) {
    %c0_i32 = arith.constant 0 : i32
    %c0_i32_0 = arith.constant 0 : i32
    %c0_i32_1 = arith.constant 0 : i32
    return %arg0, %c0_i32, %c0_i32_0 : i32, i32, i32
  }
  func.func @transform_4(%arg0: i32, %arg1: i32) -> (i32, i32) {
    %c0_i32 = arith.constant 0 : i32
    %c0_i32_0 = arith.constant 0 : i32
    %c0_i32_1 = arith.constant 0 : i32
    return %c0_i32, %c0_i32_0 : i32, i32
  }
  func.func @transform_5(%arg0: i32, %arg1: i32) -> (i32, i32) {
    %c0_i32 = arith.constant 0 : i32
    %c0_i32_0 = arith.constant 0 : i32
    %c0_i32_1 = arith.constant 0 : i32
    return %c0_i32, %c0_i32_0 : i32, i32
  }
  func.func @transform_6(%arg0: i32, %arg1: i32) -> (i32, i32) {
    %c0_i32 = arith.constant 0 : i32
    %c0_i32_0 = arith.constant 0 : i32
    %c0_i32_1 = arith.constant 0 : i32
    return %c0_i32, %c0_i32_0 : i32, i32
  }
  func.func @transform_7(%arg0: i32, %arg1: i32) -> (i32, i32, i32) {
    %c0_i32 = arith.constant 0 : i32
    %c0_i32_0 = arith.constant 0 : i32
    return %arg0, %c0_i32, %arg1 : i32, i32, i32
  }
}

</mosaic_0001>

<llo_original>
// kernel: tpu_custom_call.1
$region0: #{tpu_custom_call.1}
  #allocation0 [shape = 'u32[]', space=smem, size = 0x4, offset = 0x4, fixed_abs, tag = 'smem constant byte address 0x4 - core index']
  #allocation1 [shape = 'u32[72,128]{1,0:T(1,128)}', space=vmem, size = 0x9000, scoped, tag = 'internal scratch']
  %s0 = inlined_call_operand.vmem [shape: f32[2,32,128], index: 0, kind: input, shape index: {}]
  %s1 = inlined_call_operand.hbm [shape: f32[2,32,128], index: 1, kind: input, shape index: {}]
  %s2 = inlined_call_operand.hbm [shape: f32[2,1,128], index: 2, kind: input, shape index: {}]
  %s3 = inlined_call_operand.vmem [shape: f32[2,32,1], index: 3, kind: input, shape index: {}]
  %s4 = inlined_call_operand.vmem [shape: f32[32,32], index: 4, kind: input, shape index: {}]
  %s5 = inlined_call_operand.hbm [shape: f32[32,32], index: 5, kind: input, shape index: {}]
  %s6 = inlined_call_operand.vmem [shape: f32[32,1], index: 6, kind: input, shape index: {}]
  %s7 = inlined_call_operand.hbm [shape: f32[2,32,128], index: 7, kind: output, shape index: {}]
  %s8 = sld [smem:[#allocation0]]
  $region73: #{tpu_custom_call.1} parent=0
    _
  %s10 = ssub.s32 1, %s8
  %s11 = scalar_select 0, %s10, %s8
  $region1: #{tpu_custom_call.1} parent=0
    #allocation2 [shape = 'u8[32768]{0}', space=vmem, size = 0x8000, scoped, tag = 'input window, operand 1']
    #allocation3 [shape = 's32[2]{0}', space=sflag, size = 0x8, scoped, tag = 'scoped memory for tpu_custom_call.1']
    #allocation4 [shape = 's32[2]{0}', space=sflag, size = 0x8, scoped, tag = 'scoped memory for tpu_custom_call.1']
    #allocation5 [shape = 'u8[1024]{0}', space=vmem, size = 0x400, scoped, tag = 'input window, operand 2']
    #allocation6 [shape = 's32[2]{0}', space=sflag, size = 0x8, scoped, tag = 'scoped memory for tpu_custom_call.1']
    #allocation7 [shape = 'u8[16384]{0}', space=vmem, size = 0x4000, scoped, tag = 'input window, operand 5, single buffered']
    #allocation8 [shape = 'u8[32768]{0}', space=vmem, size = 0x8000, scoped, tag = 'output window, operand 0']
    %12 = vsyncpa [#allocation3], 0
    %s13 = scalar_lea.sflag [#allocation3], 1
    %14 = vsyncpa %s13, 0
    %15 = vsyncpa [#allocation6], 0
    %s16 = scalar_lea.sflag [#allocation6], 1
    %17 = vsyncpa %s16, 0
    %18 = vsyncpa [#allocation4], 0
    %s19 = scalar_lea.sflag [#allocation4], 1
    %20 = vsyncpa %s19, 0
    loop: start=0, step=1, limit=4
    $region2: #{tpu_custom_call.1} parent=1 // loop_pre_header
      _
    $region3: #{tpu_custom_call.1} parent=1 // loop_header
      %s22 = sphi 0, %s26
      %p23 = scmp.ge.s32.totalorder %s22, 4
      %s29 = sphi 0, %s41
      %s30 = sphi 0, %s37
      %s31 = sphi 0, %s29
      %s32 = sphi 0, %s30
      %s33 = sphi 0, %s31
      %s34 = sphi 0, %s32
      %s46 = sphi 0, %s48
      %s49 = sphi 0, %s46
      %s50 = sphi 0, %s49
      %s66 = sphi 0, %s50
      %s74 = sphi 0, %s76
      %s77 = sphi 0, %s74
      %s78 = sphi 0, %s77
      %s94 = sphi 0, %s78
      %s102 = sphi 0, %s104
      %s105 = sphi 0, %s102
      %s106 = sphi 0, %s105
      %s122 = sphi 0, %s106
      %s128 = sphi 0, %s130
      %s131 = sphi 0, %s128
      %s132 = sphi 0, %s131
      %s148 = sphi 0, %s132
      %s152 = sphi 0, %s152
      %s154 = sphi 0, %s152
      %s155 = sphi 0, %s154
      %s169 = sphi 0, %s155
      %s173 = sphi 0, %s173
      %s175 = sphi 0, %s173
      %s176 = sphi 0, %s175
      %s190 = sphi 0, %s176
      %s194 = sphi 0, %s194
      %s196 = sphi 0, %s194
      %s197 = sphi 0, %s196
      %s211 = sphi 0, %s197
      %s219 = sphi 0, %s221
      %s222 = sphi 0, %s219
      %s223 = sphi 0, %s222
      %s239 = sphi 0, %s223
    $region4: #{tpu_custom_call.1} parent=1 // loop_header_branch
      %25 = sbr.rel (%p23) target = $region8
    $region5: #{tpu_custom_call.1} parent=1 // loop_body
      %s27 = ssub.s32 %s22, 1
      %s28 = ssub.s32 %s22, 2
      %s35 = sadd.s32 1, %s30
      %p36 = scmp.ge.s32.totalorder %s35, 1
      %s37 = scalar_select %p36, 0, %s35
      %s38 = sadd.s32 1, %s29
      %s39 = scalar_select %p36, %s38, %s29
      %p40 = scmp.ge.s32.totalorder %s39, 2
      %s41 = scalar_select %p40, 0, %s39
      %s42 = ssub.s32 %s29, %s41
      %s43 = ssub.s32 %s30, %s37
      %s44 = sor.u32 %s42, %s43
      %p45 = scmp.eq.s32.totalorder %s44, 0
      %s47 = sadd.s32 %s46, 1
      %s48 = scalar_select %p45, %s46, %s47
      %p51 = pneg %p45
      %p52 = scmp.eq.s32.totalorder %s22, 1
      %p53 = por %p51, %p52
      %p54 = scmp.ne.s32.totalorder %s46, %s49
      %p55 = scmp.eq.s32.totalorder %s22, 0
      %p56 = por %p54, %p55
      %p57 = scmp.ne.s32.totalorder %s46, %s49
      %p58 = scmp.eq.s32.totalorder %s27, 1
      %p59 = por %p57, %p58
      %p60 = scmp.ne.s32.totalorder %s49, %s50
      %p61 = scmp.eq.s32.totalorder %s27, 0
      %p62 = por %p60, %p61
      %p63 = scmp.ne.s32.totalorder %s49, %s50
      %p64 = scmp.eq.s32.totalorder %s28, 1
      %p65 = por %p63, %p64
      %p67 = scmp.ne.s32.totalorder %s50, %s66
      %p68 = scmp.eq.s32.totalorder %s28, 0
      %p69 = por %p67, %p68
      %s70 = ssub.s32 %s29, %s41
      %s71 = ssub.s32 %s30, %s37
      %s72 = sor.u32 %s70, %s71
      %p73 = scmp.eq.s32.totalorder %s72, 0
      %s75 = sadd.s32 %s74, 1
      %s76 = scalar_select %p73, %s74, %s75
      %p79 = pneg %p73
      %p80 = scmp.eq.s32.totalorder %s22, 1
      %p81 = por %p79, %p80
      %p82 = scmp.ne.s32.totalorder %s74, %s77
      %p83 = scmp.eq.s32.totalorder %s22, 0
      %p84 = por %p82, %p83
      %p85 = scmp.ne.s32.totalorder %s74, %s77
      %p86 = scmp.eq.s32.totalorder %s27, 1
      %p87 = por %p85, %p86
      %p88 = scmp.ne.s32.totalorder %s77, %s78
      %p89 = scmp.eq.s32.totalorder %s27, 0
      %p90 = por %p88, %p89
      %p91 = scmp.ne.s32.totalorder %s77, %s78
      %p92 = scmp.eq.s32.totalorder %s28, 1
      %p93 = por %p91, %p92
      %p95 = scmp.ne.s32.totalorder %s78, %s94
      %p96 = scmp.eq.s32.totalorder %s28, 0
      %p97 = por %p95, %p96
      %s98 = ssub.s32 %s29, %s41
      %s99 = ssub.s32 %s30, %s37
      %s100 = sor.u32 %s98, %s99
      %p101 = scmp.eq.s32.totalorder %s100, 0
      %s103 = sadd.s32 %s102, 1
      %s104 = scalar_select %p101, %s102, %s103
      %p107 = pneg %p101
      %p108 = scmp.eq.s32.totalorder %s22, 1
      %p109 = por %p107, %p108
      %p110 = scmp.ne.s32.totalorder %s102, %s105
      %p111 = scmp.eq.s32.totalorder %s22, 0
      %p112 = por %p110, %p111
      %p113 = scmp.ne.s32.totalorder %s102, %s105
      %p114 = scmp.eq.s32.totalorder %s27, 1
      %p115 = por %p113, %p114
      %p116 = scmp.ne.s32.totalorder %s105, %s106
      %p117 = scmp.eq.s32.totalorder %s27, 0
      %p118 = por %p116, %p117
      %p119 = scmp.ne.s32.totalorder %s105, %s106
      %p120 = scmp.eq.s32.totalorder %s28, 1
      %p121 = por %p119, %p120
      %p123 = scmp.ne.s32.totalorder %s106, %s122
      %p124 = scmp.eq.s32.totalorder %s28, 0
      %p125 = por %p123, %p124
      %s126 = ssub.s32 %s29, %s41
      %p127 = scmp.eq.s32.totalorder %s126, 0
      %s129 = sadd.s32 %s128, 1
      %s130 = scalar_select %p127, %s128, %s129
      %p133 = pneg %p127
      %p134 = scmp.eq.s32.totalorder %s22, 1
      %p135 = por %p133, %p134
      %p136 = scmp.ne.s32.totalorder %s128, %s131
      %p137 = scmp.eq.s32.totalorder %s22, 0
      %p138 = por %p136, %p137
      %p139 = scmp.ne.s32.totalorder %s128, %s131
      %p140 = scmp.eq.s32.totalorder %s27, 1
      %p141 = por %p139, %p140
      %p142 = scmp.ne.s32.totalorder %s131, %s132
      %p143 = scmp.eq.s32.totalorder %s27, 0
      %p144 = por %p142, %p143
      %p145 = scmp.ne.s32.totalorder %s131, %s132
      %p146 = scmp.eq.s32.totalorder %s28, 1
      %p147 = por %p145, %p146
      %p149 = scmp.ne.s32.totalorder %s132, %s148
      %p150 = scmp.eq.s32.totalorder %s28, 0
      %p151 = por %p149, %p150
      %s153 = sadd.s32 %s152, 1
      %p156 = scmp.eq.s32.totalorder %s22, 1
      %p157 = scmp.ne.s32.totalorder %s152, %s154
      %p158 = scmp.eq.s32.totalorder %s22, 0
      %p159 = por %p157, %p158
      %p160 = scmp.ne.s32.totalorder %s152, %s154
      %p161 = scmp.eq.s32.totalorder %s27, 1
      %p162 = por %p160, %p161
      %p163 = scmp.ne.s32.totalorder %s154, %s155
      %p164 = scmp.eq.s32.totalorder %s27, 0
      %p165 = por %p163, %p164
      %p166 = scmp.ne.s32.totalorder %s154, %s155
      %p167 = scmp.eq.s32.totalorder %s28, 1
      %p168 = por %p166, %p167
      %p170 = scmp.ne.s32.totalorder %s155, %s169
      %p171 = scmp.eq.s32.totalorder %s28, 0
      %p172 = por %p170, %p171
      %s174 = sadd.s32 %s173, 1
      %p177 = scmp.eq.s32.totalorder %s22, 1
      %p178 = scmp.ne.s32.totalorder %s173, %s175
      %p179 = scmp.eq.s32.totalorder %s22, 0
      %p180 = por %p178, %p179
      %p181 = scmp.ne.s32.totalorder %s173, %s175
      %p182 = scmp.eq.s32.totalorder %s27, 1
      %p183 = por %p181, %p182
      %p184 = scmp.ne.s32.totalorder %s175, %s176
      %p185 = scmp.eq.s32.totalorder %s27, 0
      %p186 = por %p184, %p185
      %p187 = scmp.ne.s32.totalorder %s175, %s176
      %p188 = scmp.eq.s32.totalorder %s28, 1
      %p189 = por %p187, %p188
      %p191 = scmp.ne.s32.totalorder %s176, %s190
      %p192 = scmp.eq.s32.totalorder %s28, 0
      %p193 = por %p191, %p192
      %s195 = sadd.s32 %s194, 1
      %p198 = scmp.eq.s32.totalorder %s22, 1
      %p199 = scmp.ne.s32.totalorder %s194, %s196
      %p200 = scmp.eq.s32.totalorder %s22, 0
      %p201 = por %p199, %p200
      %p202 = scmp.ne.s32.totalorder %s194, %s196
      %p203 = scmp.eq.s32.totalorder %s27, 1
      %p204 = por %p202, %p203
      %p205 = scmp.ne.s32.totalorder %s196, %s197
      %p206 = scmp.eq.s32.totalorder %s27, 0
      %p207 = por %p205, %p206
      %p208 = scmp.ne.s32.totalorder %s196, %s197
      %p209 = scmp.eq.s32.totalorder %s28, 1
      %p210 = por %p208, %p209
      %p212 = scmp.ne.s32.totalorder %s197, %s211
      %p213 = scmp.eq.s32.totalorder %s28, 0
      %p214 = por %p212, %p213
      %s215 = ssub.s32 %s29, %s41
      %s216 = ssub.s32 %s30, %s37
      %s217 = sor.u32 %s215, %s216
      %p218 = scmp.eq.s32.totalorder %s217, 0
      %s220 = sadd.s32 %s219, 1
      %s221 = scalar_select %p218, %s219, %s220
      %p224 = pneg %p218
      %p225 = scmp.eq.s32.totalorder %s22, 1
      %p226 = por %p224, %p225
      %p227 = scmp.ne.s32.totalorder %s219, %s222
      %p228 = scmp.eq.s32.totalorder %s22, 0
      %p229 = por %p227, %p228
      %p230 = scmp.ne.s32.totalorder %s219, %s222
      %p231 = scmp.eq.s32.totalorder %s27, 1
      %p232 = por %p230, %p231
      %p233 = scmp.ne.s32.totalorder %s222, %s223
      %p234 = scmp.eq.s32.totalorder %s27, 0
      %p235 = por %p233, %p234
      %p236 = scmp.ne.s32.totalorder %s222, %s223
      %p237 = scmp.eq.s32.totalorder %s28, 1
      %p238 = por %p236, %p237
      %p240 = scmp.ne.s32.totalorder %s223, %s239
      %p241 = scmp.eq.s32.totalorder %s28, 0
      %p242 = por %p240, %p241
      %p243 = scmp.le.s32.totalorder 1, %s22
      %p244 = scmp.lt.s32.totalorder %s22, 3
      %p245 = pnand %p243, %p244
      %p246 = pneg %p245
      // Predicated region
      $region9: #{tpu_custom_call.1} parent=5 // pred_check
        _
      $region10: #{tpu_custom_call.1} parent=5 // pred_check_branch
        %248 = sbr.rel (%p245) target = $region12
      $region11: #{tpu_custom_call.1} parent=5 // pred_region
        %s249 = ssub.s32 %s22, 1
        // Predicated region
        $region13: #{tpu_custom_call.1} parent=11 // pred_check
          %p250 = pneg %p165
        $region14: #{tpu_custom_call.1} parent=11 // pred_check_branch
          %252 = sbr.rel (%p250) target = $region16
        $region15: #{tpu_custom_call.1} parent=11 // pred_region
          _
        $region16: #{tpu_custom_call.1} parent=11 // pred_fallthru
          _
        // Predicated region
        $region17: #{tpu_custom_call.1} parent=11 // pred_check
          %p253 = pneg %p186
        $region18: #{tpu_custom_call.1} parent=11 // pred_check_branch
          %255 = sbr.rel (%p253) target = $region20
        $region19: #{tpu_custom_call.1} parent=11 // pred_region
          %257 = vsyncadd [#allocation6], 0
          %s258 = sshll.u32 %s5, 4
          %s259 = int_to_ptr.hbm [resolvable:$true] %s258
          %s260 = sshll.u32 [#allocation7], 4
          %s261 = int_to_ptr.vmem [resolvable:$true] %s260
          %266 = dma.hbm_to_vmem [thread:$0]  %s259, 512, %s261, [#allocation6], 128, 128, 8
        $region20: #{tpu_custom_call.1} parent=11 // pred_fallthru
          _
        // Predicated region
        $region21: #{tpu_custom_call.1} parent=11 // pred_check
          %p267 = pneg %p207
        $region22: #{tpu_custom_call.1} parent=11 // pred_check_branch
          %269 = sbr.rel (%p267) target = $region24
        $region23: #{tpu_custom_call.1} parent=11 // pred_region
          _
        $region24: #{tpu_custom_call.1} parent=11 // pred_fallthru
          _
      $region12: #{tpu_custom_call.1} parent=5 // pred_fallthru
        _
      %p270 = scmp.lt.s32.totalorder %s22, 2
      // Predicated region
      $region25: #{tpu_custom_call.1} parent=5 // pred_check
        %p271 = pneg %p270
      $region26: #{tpu_custom_call.1} parent=5 // pred_check_branch
        %273 = sbr.rel (%p271) target = $region28
      $region27: #{tpu_custom_call.1} parent=5 // pred_region
        // Predicated region
        $region29: #{tpu_custom_call.1} parent=27 // pred_check
          %p274 = pneg %p56
        $region30: #{tpu_custom_call.1} parent=27 // pred_check_branch
          %276 = sbr.rel (%p274) target = $region32
        $region31: #{tpu_custom_call.1} parent=27 // pred_region
          %p277 = scmp.lt.s32.totalorder %s29, 1
          %s278 = scalar_select %p277, %s29, 1
          %p279 = scmp.lt.s32.totalorder %s30, 0
          %s280 = scalar_select %p279, %s30, 0
          %s281 = smul.addr %s278, 4
          %s282 = sadd.s32 %s280, %s281
          %s283 = smul.addr %s282, 8
          %s284 = scalar_lea.vmem %s0, %s283
        $region32: #{tpu_custom_call.1} parent=27 // pred_fallthru
          _
        // Predicated region
        $region33: #{tpu_custom_call.1} parent=27 // pred_check
          %p285 = pneg %p84
        $region34: #{tpu_custom_call.1} parent=27 // pred_check_branch
          %287 = sbr.rel (%p285) target = $region36
        $region35: #{tpu_custom_call.1} parent=27 // pred_region
          %s288 = sand.u32 %s74, 1
          %s289 = scalar_lea.sflag [#allocation3], %s288
          %s290 = sand.u32 %s74, 1
          %s291 = smul.addr %s290, 32
          %s292 = scalar_lea.vmem [#allocation2], %s291
          %294 = vsyncadd %s289, 0
          %s295 = smul.addr %s29, 4
          %s296 = sadd.s32 %s30, %s295
          %s297 = smul.addr %s296, 8
          %s298 = scalar_lea.hbm %s1, %s297
          %s299 = sshll.u32 %s298, 4
          %s300 = int_to_ptr.hbm [resolvable:$true] %s299
          %s301 = sshll.u32 %s292, 4
          %s302 = int_to_ptr.vmem [resolvable:$true] %s301
          %307 = dma.hbm_to_vmem [thread:$0]  %s300, 512, %s302, %s289, 128, 128, 8
        $region36: #{tpu_custom_call.1} parent=27 // pred_fallthru
          _
        // Predicated region
        $region37: #{tpu_custom_call.1} parent=27 // pred_check
          %p308 = pneg %p112
        $region38: #{tpu_custom_call.1} parent=27 // pred_check_branch
          %310 = sbr.rel (%p308) target = $region40
        $region39: #{tpu_custom_call.1} parent=27 // pred_region
          %s311 = sand.u32 %s22, 1
          %s312 = scalar_lea.sflag [#allocation6], %s311
          %s313 = sand.u32 %s102, 1
          %s314 = scalar_lea.vmem [#allocation5], %s313
          %316 = vsyncadd %s312, 0
          %s317 = sadd.s32 %s30, %s29
          %s318 = scalar_lea.hbm %s2, %s317
          %s320 = sshll.u32 %s318, 4
          %s321 = int_to_ptr.hbm [resolvable:$true] %s320
          %s322 = sshll.u32 %s314, 4
          %s323 = int_to_ptr.vmem [resolvable:$true] %s322
          %325 = dma.hbm_to_vmem [thread:$0]  %s321, 16, %s323, %s312
        $region40: #{tpu_custom_call.1} parent=27 // pred_fallthru
          _
        // Predicated region
        $region41: #{tpu_custom_call.1} parent=27 // pred_check
          %p326 = pneg %p138
        $region42: #{tpu_custom_call.1} parent=27 // pred_check_branch
          %328 = sbr.rel (%p326) target = $region44
        $region43: #{tpu_custom_call.1} parent=27 // pred_region
          %p329 = scmp.lt.s32.totalorder %s29, 1
          %s330 = scalar_select %p329, %s29, 1
          %s331 = smul.addr %s330, 4
          %s332 = smul.addr %s331, 8
          %s333 = scalar_lea.vmem %s3, %s332
        $region44: #{tpu_custom_call.1} parent=27 // pred_fallthru
          _
      $region28: #{tpu_custom_call.1} parent=5 // pred_fallthru
        _
      %p334 = scmp.le.s32.totalorder 1, %s22
      %p335 = scmp.lt.s32.totalorder %s22, 3
      %p336 = pnand %p334, %p335
      %p337 = pneg %p336
      // Predicated region
      $region45: #{tpu_custom_call.1} parent=5 // pred_check
        _
      $region46: #{tpu_custom_call.1} parent=5 // pred_check_branch
        %339 = sbr.rel (%p336) target = $region48
      $region47: #{tpu_custom_call.1} parent=5 // pred_region
        %s340 = ssub.s32 %s22, 1
        %s341 = sand.u32 %s77, 1
        %s342 = scalar_lea.sflag [#allocation3], %s341
        %s343 = sand.u32 %s77, 1
        %s344 = smul.addr %s343, 32
        %s345 = scalar_lea.vmem [#allocation2], %s344
        // Predicated region
        $region49: #{tpu_custom_call.1} parent=47 // pred_check
          %p346 = pneg %p90
        $region50: #{tpu_custom_call.1} parent=47 // pred_check_branch
          %348 = sbr.rel (%p346) target = $region52
        $region51: #{tpu_custom_call.1} parent=47 // pred_region
          %350 = dma.done %s342, 512
        $region52: #{tpu_custom_call.1} parent=47 // pred_fallthru
          _
        %s351 = sand.u32 %s27, 1
        %s352 = scalar_lea.sflag [#allocation6], %s351
        %s353 = sand.u32 %s105, 1
        %s354 = scalar_lea.vmem [#allocation5], %s353
        // Predicated region
        $region53: #{tpu_custom_call.1} parent=47 // pred_check
          %p355 = pneg %p118
        $region54: #{tpu_custom_call.1} parent=47 // pred_check_branch
          %357 = sbr.rel (%p355) target = $region56
        $region55: #{tpu_custom_call.1} parent=47 // pred_region
          %359 = dma.done %s352, 16
        $region56: #{tpu_custom_call.1} parent=47 // pred_fallthru
          _
        // Predicated region
        $region57: #{tpu_custom_call.1} parent=47 // pred_check
          %p360 = pneg %p186
        $region58: #{tpu_custom_call.1} parent=47 // pred_check_branch
          %362 = sbr.rel (%p360) target = $region60
        $region59: #{tpu_custom_call.1} parent=47 // pred_region
          %364 = dma.done [#allocation6], 512
        $region60: #{tpu_custom_call.1} parent=47 // pred_fallthru
          _
        %p365 = scmp.lt.s32.totalorder %s31, 1
        %s366 = scalar_select %p365, %s31, 1
        %p367 = scmp.lt.s32.totalorder %s32, 0
        %s368 = scalar_select %p367, %s32, 0
        %s369 = smul.addr %s366, 4
        %s370 = sadd.s32 %s368, %s369
        %s371 = smul.addr %s370, 8
        %s372 = scalar_lea.vmem %s0, %s371
        %p373 = pneg %p62
        %p374 = pneg %p59
        %s375 = sand.u32 %s77, 1
        %s376 = scalar_lea.sflag [#allocation3], %s375
        %s377 = sand.u32 %s77, 1
        %s378 = smul.addr %s377, 32
        %s379 = scalar_lea.vmem [#allocation2], %s378
        %p380 = pneg %p90
        %p381 = pneg %p87
        %s382 = sand.u32 %s27, 1
        %s383 = scalar_lea.sflag [#allocation6], %s382
        %s384 = sand.u32 %s105, 1
        %s385 = scalar_lea.vmem [#allocation5], %s384
        %p386 = pneg %p118
        %p387 = pneg %p115
        %p388 = scmp.lt.s32.totalorder %s31, 1
        %s389 = scalar_select %p388, %s31, 1
        %s390 = smul.addr %s389, 4
        %s391 = smul.addr %s390, 8
        %s392 = scalar_lea.vmem %s3, %s391
        %p393 = pneg %p144
        %p394 = pneg %p141
        %p395 = pneg %p165
        %p396 = pneg %p162
        %p397 = pneg %p186
        %p398 = pneg %p183
        %p399 = pneg %p207
        %p400 = pneg %p204
        %p401 = pneg %p235
        %p402 = pneg %p232
        %s403 = sand.u32 %s222, 1
        %s404 = scalar_lea.sflag [#allocation4], %s403
        %s405 = sand.u32 %s222, 1
        %s406 = smul.addr %s405, 32
        %s407 = scalar_lea.vmem [#allocation8], %s406
        %p408 = scmp.lt.s32.totalorder %s31, 1
        %s409 = scalar_select %p408, %s31, 1
        %p410 = scmp.lt.s32.totalorder %s32, 0
        %s411 = scalar_select %p410, %s32, 0
        %s412 = smul.addr %s409, 4
        %s413 = sadd.s32 %s411, %s412
        %s414 = smul.addr %s413, 8
        %s415 = scalar_lea.vmem %s0, %s414
        %p416 = scmp.lt.s32.totalorder %s31, 1
        %s417 = scalar_select %p416, %s31, 1
        %s418 = smul.addr %s417, 4
        %s419 = smul.addr %s418, 8
        %s420 = scalar_lea.vmem %s3, %s419
        %v421 = vld [vmem:[%s354] sm:$0x1]
        %v422 = vld [vmem:[%s6] sm:$0xff]
        %v423 = vld [vmem:[%s6 + $0x8] sm:$0xff]
        %v424 = vld [vmem:[%s6 + $0x10] sm:$0xff]
        %v425 = vld [vmem:[%s6 + $0x18] sm:$0xff]
        %v426 = vld [vmem:[%s4] sm:$0xff]
        %v427 = vld [vmem:[%s4 + $0x8] sm:$0xff]
        %v428 = vld [vmem:[%s4 + $0x10] sm:$0xff]
        %v429 = vld [vmem:[%s4 + $0x18] sm:$0xff]
        %v430 = vld [vmem:[#allocation7] sm:$0xff]
        %v431 = vld [vmem:[#allocation7 + $0x8] sm:$0xff]
        %v432 = vld [vmem:[#allocation7 + $0x10] sm:$0xff]
        %v433 = vld [vmem:[#allocation7 + $0x18] sm:$0xff]
        %v434 = vld [vmem:[%s345] sm:$0xff]
        %v435 = vld [vmem:[%s345 + $0x8] sm:$0xff]
        %v436 = vld [vmem:[%s345 + $0x10] sm:$0xff]
        %v437 = vld [vmem:[%s345 + $0x18] sm:$0xff]
        %v438 = vld [vmem:[%s420] sm:$0xff]
        %v439 = vld [vmem:[%s420 + $0x8] sm:$0xff]
        %v440 = vld [vmem:[%s420 + $0x10] sm:$0xff]
        %v441 = vld [vmem:[%s420 + $0x18] sm:$0xff]
        %443 = vset.pattern.permute.xlu0 0
        %444 = vperm.xlu0 %443, %v438
        %v445 = vpop.permute.xlu0 %444
        %448 = vset.pattern.permute.xlu0 0
        %449 = vperm.xlu0 %448, %v439
        %v450 = vpop.permute.xlu0 %449
        %453 = vset.pattern.permute.xlu0 0
        %454 = vperm.xlu0 %453, %v440
        %v455 = vpop.permute.xlu0 %454
        %458 = vset.pattern.permute.xlu0 0
        %459 = vperm.xlu0 %458, %v441
        %v460 = vpop.permute.xlu0 %459
        %vm462 = vcmask 261120
        %v464 = vsel %vm462, %v430, 0
        %v467 = vsel %vm462, %v431, 0
        %v470 = vsel %vm462, %v432, 0
        %v473 = vsel %vm462, %v433, 0
        %475 = vmatpush.msra.mxu0 0.0
        %476 = vmatpush.msra.mxu0 0.0
        %477 = vmatpush.msra.mxu0 0.0
        %478 = vmatpush.msra.mxu0 0.0
        %479 = vmatpush.msra.mxu0 0.0
        %480 = vmatpush.msra.mxu0 0.0
        %481 = vmatpush.msra.mxu0 0.0
        %482 = vmatpush.msra.mxu0 0.0
        %483 = vmatpush.msra.mxu0 0.0
        %484 = vmatpush.msra.mxu0 0.0
        %485 = vmatpush.msra.mxu0 0.0
        %486 = vmatpush.msra.mxu0 0.0
        %487 = vmatpush.msra.mxu0 %v437
        %488 = vmatpush.msra.mxu0 %v436
        %489 = vmatpush.msra.mxu0 %v435
        %490 = vmatpush.msra.mxu0 %v434
        %491 = vmatmul.f32.gmra.mxu0 %v464
        %v492 = vpop.f32.mrf.mxu0
        %v493 = vadd.f32 %v445, %v492
        %494 = vmatmul.f32.gmra.mxu0 %v467
        %v495 = vpop.f32.mrf.mxu0
        %v496 = vadd.f32 %v450, %v495
        %497 = vmatmul.f32.gmra.mxu0 %v470
        %v498 = vpop.f32.mrf.mxu0
        %v499 = vadd.f32 %v455, %v498
        %500 = vmatmul.f32.gmra.mxu0 %v473
        %v501 = vpop.f32.mrf.mxu0
        %v502 = vadd.f32 %v460, %v501
        %503 = vdwg.mxu0
        %v504 = vld [vmem:[%s415] sm:$0xff]
        %v505 = vld [vmem:[%s415 + $0x8] sm:$0xff]
        %v506 = vld [vmem:[%s415 + $0x10] sm:$0xff]
        %v507 = vld [vmem:[%s415 + $0x18] sm:$0xff]
        %v509 = vsel %vm462, %v426, 0
        %v512 = vsel %vm462, %v427, 0
        %v515 = vsel %vm462, %v428, 0
        %v518 = vsel %vm462, %v429, 0
        %520 = vmatpush.msra.mxu0 0.0
        %521 = vmatpush.msra.mxu0 0.0
        %522 = vmatpush.msra.mxu0 0.0
        %523 = vmatpush.msra.mxu0 0.0
        %524 = vmatpush.msra.mxu0 0.0
        %525 = vmatpush.msra.mxu0 0.0
        %526 = vmatpush.msra.mxu0 0.0
        %527 = vmatpush.msra.mxu0 0.0
        %528 = vmatpush.msra.mxu0 0.0
        %529 = vmatpush.msra.mxu0 0.0
        %530 = vmatpush.msra.mxu0 0.0
        %531 = vmatpush.msra.mxu0 0.0
        %532 = vmatpush.msra.mxu0 %v507
        %533 = vmatpush.msra.mxu0 %v506
        %534 = vmatpush.msra.mxu0 %v505
        %535 = vmatpush.msra.mxu0 %v504
        %536 = vmatmul.f32.gmra.mxu0 %v509
        %v537 = vpop.f32.mrf.mxu0
        %v538 = vadd.f32 %v493, %v537
        %539 = vmatmul.f32.gmra.mxu0 %v512
        %v540 = vpop.f32.mrf.mxu0
        %v541 = vadd.f32 %v496, %v540
        %542 = vmatmul.f32.gmra.mxu0 %v515
        %v543 = vpop.f32.mrf.mxu0
        %v544 = vadd.f32 %v499, %v543
        %545 = vmatmul.f32.gmra.mxu0 %v518
        %v546 = vpop.f32.mrf.mxu0
        %v547 = vadd.f32 %v502, %v546
        %548 = vdwg.mxu0
        %v549 = vmul.f32 %v422, 0.0
        %v550 = vmul.f32 %v423, 0.0
        %v551 = vmul.f32 %v424, 0.0
        %v552 = vmul.f32 %v425, 0.0
        %554 = vset.pattern.permute.xlu0 0
        %555 = vperm.xlu0 %554, %v549
        %v556 = vpop.permute.xlu0 %555
        %559 = vset.pattern.permute.xlu0 0
        %560 = vperm.xlu0 %559, %v550
        %v561 = vpop.permute.xlu0 %560
        %564 = vset.pattern.permute.xlu0 0
        %565 = vperm.xlu0 %564, %v551
        %v566 = vpop.permute.xlu0 %565
        %569 = vset.pattern.permute.xlu0 0
        %570 = vperm.xlu0 %569, %v552
        %v571 = vpop.permute.xlu0 %570
        %v573 = vadd.f32 %v538, %v556
        %v574 = vadd.f32 %v541, %v561
        %v575 = vadd.f32 %v544, %v566
        %v576 = vadd.f32 %v547, %v571
        %v577 = vtanh.pop %v573
        %v578 = vtanh.pop %v574
        %v579 = vtanh.pop %v575
        %v580 = vtanh.pop %v576
        %v581 = vmul.f32 %v421, 0.125
        %v583 = vperm.slane %v581, 0
        %v585 = vmul.f32 %v577, %v583
        %v586 = vmul.f32 %v578, %v583
        %v587 = vmul.f32 %v579, %v583
        %v588 = vmul.f32 %v580, %v583
        %v589 = vadd.f32 %v504, %v585
        %v590 = vadd.f32 %v505, %v586
        %v591 = vadd.f32 %v506, %v587
        %v592 = vadd.f32 %v507, %v588
        %593 = vmatpush.msra.mxu0 0.0
        %594 = vmatpush.msra.mxu0 0.0
        %595 = vmatpush.msra.mxu0 0.0
        %596 = vmatpush.msra.mxu0 0.0
        %597 = vmatpush.msra.mxu0 0.0
        %598 = vmatpush.msra.mxu0 0.0
        %599 = vmatpush.msra.mxu0 0.0
        %600 = vmatpush.msra.mxu0 0.0
        %601 = vmatpush.msra.mxu0 0.0
        %602 = vmatpush.msra.mxu0 0.0
        %603 = vmatpush.msra.mxu0 0.0
        %604 = vmatpush.msra.mxu0 0.0
        %605 = vmatpush.msra.mxu0 %v592
        %606 = vmatpush.msra.mxu0 %v591
        %607 = vmatpush.msra.mxu0 %v590
        %608 = vmatpush.msra.mxu0 %v589
        %609 = vmatmul.f32.gmra.mxu0 %v509
        %v610 = vpop.f32.mrf.mxu0
        %v611 = vadd.f32 %v493, %v610
        %612 = vmatmul.f32.gmra.mxu0 %v512
        %v613 = vpop.f32.mrf.mxu0
        %v614 = vadd.f32 %v496, %v613
        %615 = vmatmul.f32.gmra.mxu0 %v515
        %v616 = vpop.f32.mrf.mxu0
        %v617 = vadd.f32 %v499, %v616
        %618 = vmatmul.f32.gmra.mxu0 %v518
        %v619 = vpop.f32.mrf.mxu0
        %v620 = vadd.f32 %v502, %v619
        %621 = vdwg.mxu0
        %v622 = vmul.f32 %v422, 0.125
        %v623 = vmul.f32 %v423, 0.125
        %v624 = vmul.f32 %v424, 0.125
        %v625 = vmul.f32 %v425, 0.125
        %627 = vset.pattern.permute.xlu0 0
        %628 = vperm.xlu0 %627, %v622
        %v629 = vpop.permute.xlu0 %628
        %632 = vset.pattern.permute.xlu0 0
        %633 = vperm.xlu0 %632, %v623
        %v634 = vpop.permute.xlu0 %633
        %637 = vset.pattern.permute.xlu0 0
        %638 = vperm.xlu0 %637, %v624
        %v639 = vpop.permute.xlu0 %638
        %642 = vset.pattern.permute.xlu0 0
        %643 = vperm.xlu0 %642, %v625
        %v644 = vpop.permute.xlu0 %643
        %v646 = vadd.f32 %v611, %v629
        %v647 = vadd.f32 %v614, %v634
        %v648 = vadd.f32 %v617, %v639
        %v649 = vadd.f32 %v620, %v644
        %v650 = vtanh.pop %v646
        %v651 = vtanh.pop %v647
        %v652 = vtanh.pop %v648
        %v653 = vtanh.pop %v649
        %v654 = vmul.f32 %v650, %v583
        %v655 = vmul.f32 %v651, %v583
        %v656 = vmul.f32 %v652, %v583
        %v657 = vmul.f32 %v653, %v583
        %v658 = vadd.f32 %v589, %v654
        %v659 = vadd.f32 %v590, %v655
        %v660 = vadd.f32 %v591, %v656
        %v661 = vadd.f32 %v592, %v657
        %662 = vmatpush.msra.mxu0 0.0
        %663 = vmatpush.msra.mxu0 0.0
        %664 = vmatpush.msra.mxu0 0.0
        %665 = vmatpush.msra.mxu0 0.0
        %666 = vmatpush.msra.mxu0 0.0
        %667 = vmatpush.msra.mxu0 0.0
        %668 = vmatpush.msra.mxu0 0.0
        %669 = vmatpush.msra.mxu0 0.0
        %670 = vmatpush.msra.mxu0 0.0
        %671 = vmatpush.msra.mxu0 0.0
        %672 = vmatpush.msra.mxu0 0.0
        %673 = vmatpush.msra.mxu0 0.0
        %674 = vmatpush.msra.mxu0 %v661
        %675 = vmatpush.msra.mxu0 %v660
        %676 = vmatpush.msra.mxu0 %v659
        %677 = vmatpush.msra.mxu0 %v658
        %678 = vmatmul.f32.gmra.mxu0 %v509
        %v679 = vpop.f32.mrf.mxu0
        %v680 = vadd.f32 %v493, %v679
        %681 = vmatmul.f32.gmra.mxu0 %v512
        %v682 = vpop.f32.mrf.mxu0
        %v683 = vadd.f32 %v496, %v682
        %684 = vmatmul.f32.gmra.mxu0 %v515
        %v685 = vpop.f32.mrf.mxu0
        %v686 = vadd.f32 %v499, %v685
        %687 = vmatmul.f32.gmra.mxu0 %v518
        %v688 = vpop.f32.mrf.mxu0
        %v689 = vadd.f32 %v502, %v688
        %690 = vdwg.mxu0
        %v691 = vmul.f32 %v422, 0.25
        %v692 = vmul.f32 %v423, 0.25
        %v693 = vmul.f32 %v424, 0.25
        %v694 = vmul.f32 %v425, 0.25
        %696 = vset.pattern.permute.xlu0 0
        %697 = vperm.xlu0 %696, %v691
        %v698 = vpop.permute.xlu0 %697
        %701 = vset.pattern.permute.xlu0 0
        %702 = vperm.xlu0 %701, %v692
        %v703 = vpop.permute.xlu0 %702
        %706 = vset.pattern.permute.xlu0 0
        %707 = vperm.xlu0 %706, %v693
        %v708 = vpop.permute.xlu0 %707
        %711 = vset.pattern.permute.xlu0 0
        %712 = vperm.xlu0 %711, %v694
        %v713 = vpop.permute.xlu0 %712
        %v715 = vadd.f32 %v680, %v698
        %v716 = vadd.f32 %v683, %v703
        %v717 = vadd.f32 %v686, %v708
        %v718 = vadd.f32 %v689, %v713
        %v719 = vtanh.pop %v715
        %v720 = vtanh.pop %v716
        %v721 = vtanh.pop %v717
        %v722 = vtanh.pop %v718
        %v723 = vmul.f32 %v719, %v583
        %v724 = vmul.f32 %v720, %v583
        %v725 = vmul.f32 %v721, %v583
        %v726 = vmul.f32 %v722, %v583
        %v727 = vadd.f32 %v658, %v723
        %v728 = vadd.f32 %v659, %v724
        %v729 = vadd.f32 %v660, %v725
        %v730 = vadd.f32 %v661, %v726
        %731 = vmatpush.msra.mxu0 0.0
        %732 = vmatpush.msra.mxu0 0.0
        %733 = vmatpush.msra.mxu0 0.0
        %734 = vmatpush.msra.mxu0 0.0
        %735 = vmatpush.msra.mxu0 0.0
        %736 = vmatpush.msra.mxu0 0.0
        %737 = vmatpush.msra.mxu0 0.0
        %738 = vmatpush.msra.mxu0 0.0
        %739 = vmatpush.msra.mxu0 0.0
        %740 = vmatpush.msra.mxu0 0.0
        %741 = vmatpush.msra.mxu0 0.0
        %742 = vmatpush.msra.mxu0 0.0
        %743 = vmatpush.msra.mxu0 %v730
        %744 = vmatpush.msra.mxu0 %v729
        %745 = vmatpush.msra.mxu0 %v728
        %746 = vmatpush.msra.mxu0 %v727
        %747 = vmatmul.f32.gmra.mxu0 %v509
        %v748 = vpop.f32.mrf.mxu0
        %v749 = vadd.f32 %v493, %v748
        %750 = vmatmul.f32.gmra.mxu0 %v512
        %v751 = vpop.f32.mrf.mxu0
        %v752 = vadd.f32 %v496, %v751
        %753 = vmatmul.f32.gmra.mxu0 %v515
        %v754 = vpop.f32.mrf.mxu0
        %v755 = vadd.f32 %v499, %v754
        %756 = vmatmul.f32.gmra.mxu0 %v518
        %v757 = vpop.f32.mrf.mxu0
        %v758 = vadd.f32 %v502, %v757
        %759 = vdwg.mxu0
        %v760 = vmul.f32 %v422, 0.375
        %v761 = vmul.f32 %v423, 0.375
        %v762 = vmul.f32 %v424, 0.375
        %v763 = vmul.f32 %v425, 0.375
        %765 = vset.pattern.permute.xlu0 0
        %766 = vperm.xlu0 %765, %v760
        %v767 = vpop.permute.xlu0 %766
        %770 = vset.pattern.permute.xlu0 0
        %771 = vperm.xlu0 %770, %v761
        %v772 = vpop.permute.xlu0 %771
        %775 = vset.pattern.permute.xlu0 0
        %776 = vperm.xlu0 %775, %v762
        %v777 = vpop.permute.xlu0 %776
        %780 = vset.pattern.permute.xlu0 0
        %781 = vperm.xlu0 %780, %v763
        %v782 = vpop.permute.xlu0 %781
        %v784 = vadd.f32 %v749, %v767
        %v785 = vadd.f32 %v752, %v772
        %v786 = vadd.f32 %v755, %v777
        %v787 = vadd.f32 %v758, %v782
        %v788 = vtanh.pop %v784
        %v789 = vtanh.pop %v785
        %v790 = vtanh.pop %v786
        %v791 = vtanh.pop %v787
        %v792 = vmul.f32 %v788, %v583
        %v793 = vmul.f32 %v789, %v583
        %v794 = vmul.f32 %v790, %v583
        %v795 = vmul.f32 %v791, %v583
        %v796 = vadd.f32 %v727, %v792
        %v797 = vadd.f32 %v728, %v793
        %v798 = vadd.f32 %v729, %v794
        %v799 = vadd.f32 %v730, %v795
        %800 = vmatpush.msra.mxu0 0.0
        %801 = vmatpush.msra.mxu0 0.0
        %802 = vmatpush.msra.mxu0 0.0
        %803 = vmatpush.msra.mxu0 0.0
        %804 = vmatpush.msra.mxu0 0.0
        %805 = vmatpush.msra.mxu0 0.0
        %806 = vmatpush.msra.mxu0 0.0
        %807 = vmatpush.msra.mxu0 0.0
        %808 = vmatpush.msra.mxu0 0.0
        %809 = vmatpush.msra.mxu0 0.0
        %810 = vmatpush.msra.mxu0 0.0
        %811 = vmatpush.msra.mxu0 0.0
        %812 = vmatpush.msra.mxu0 %v799
        %813 = vmatpush.msra.mxu0 %v798
        %814 = vmatpush.msra.mxu0 %v797
        %815 = vmatpush.msra.mxu0 %v796
        %816 = vmatmul.f32.gmra.mxu0 %v509
        %v817 = vpop.f32.mrf.mxu0
        %v818 = vadd.f32 %v493, %v817
        %819 = vmatmul.f32.gmra.mxu0 %v512
        %v820 = vpop.f32.mrf.mxu0
        %v821 = vadd.f32 %v496, %v820
        %822 = vmatmul.f32.gmra.mxu0 %v515
        %v823 = vpop.f32.mrf.mxu0
        %v824 = vadd.f32 %v499, %v823
        %825 = vmatmul.f32.gmra.mxu0 %v518
        %v826 = vpop.f32.mrf.mxu0
        %v827 = vadd.f32 %v502, %v826
        %828 = vdwg.mxu0
        %v829 = vmul.f32 %v422, 0.5
        %v830 = vmul.f32 %v423, 0.5
        %v831 = vmul.f32 %v424, 0.5
        %v832 = vmul.f32 %v425, 0.5
        %834 = vset.pattern.permute.xlu0 0
        %835 = vperm.xlu0 %834, %v829
        %v836 = vpop.permute.xlu0 %835
        %839 = vset.pattern.permute.xlu0 0
        %840 = vperm.xlu0 %839, %v830
        %v841 = vpop.permute.xlu0 %840
        %844 = vset.pattern.permute.xlu0 0
        %845 = vperm.xlu0 %844, %v831
        %v846 = vpop.permute.xlu0 %845
        %849 = vset.pattern.permute.xlu0 0
        %850 = vperm.xlu0 %849, %v832
        %v851 = vpop.permute.xlu0 %850
        %v853 = vadd.f32 %v818, %v836
        %v854 = vadd.f32 %v821, %v841
        %v855 = vadd.f32 %v824, %v846
        %v856 = vadd.f32 %v827, %v851
        %v857 = vtanh.pop %v853
        %v858 = vtanh.pop %v854
        %v859 = vtanh.pop %v855
        %v860 = vtanh.pop %v856
        %v861 = vmul.f32 %v857, %v583
        %v862 = vmul.f32 %v858, %v583
        %v863 = vmul.f32 %v859, %v583
        %v864 = vmul.f32 %v860, %v583
        %v865 = vadd.f32 %v796, %v861
        %v866 = vadd.f32 %v797, %v862
        %v867 = vadd.f32 %v798, %v863
        %v868 = vadd.f32 %v799, %v864
        %869 = vmatpush.msra.mxu0 0.0
        %870 = vmatpush.msra.mxu0 0.0
        %871 = vmatpush.msra.mxu0 0.0
        %872 = vmatpush.msra.mxu0 0.0
        %873 = vmatpush.msra.mxu0 0.0
        %874 = vmatpush.msra.mxu0 0.0
        %875 = vmatpush.msra.mxu0 0.0
        %876 = vmatpush.msra.mxu0 0.0
        %877 = vmatpush.msra.mxu0 0.0
        %878 = vmatpush.msra.mxu0 0.0
        %879 = vmatpush.msra.mxu0 0.0
        %880 = vmatpush.msra.mxu0 0.0
        %881 = vmatpush.msra.mxu0 %v868
        %882 = vmatpush.msra.mxu0 %v867
        %883 = vmatpush.msra.mxu0 %v866
        %884 = vmatpush.msra.mxu0 %v865
        %885 = vmatmul.f32.gmra.mxu0 %v509
        %v886 = vpop.f32.mrf.mxu0
        %v887 = vadd.f32 %v493, %v886
        %888 = vmatmul.f32.gmra.mxu0 %v512
        %v889 = vpop.f32.mrf.mxu0
        %v890 = vadd.f32 %v496, %v889
        %891 = vmatmul.f32.gmra.mxu0 %v515
        %v892 = vpop.f32.mrf.mxu0
        %v893 = vadd.f32 %v499, %v892
        %894 = vmatmul.f32.gmra.mxu0 %v518
        %v895 = vpop.f32.mrf.mxu0
        %v896 = vadd.f32 %v502, %v895
        %897 = vdwg.mxu0
        %v898 = vmul.f32 %v422, 0.625
        %v899 = vmul.f32 %v423, 0.625
        %v900 = vmul.f32 %v424, 0.625
        %v901 = vmul.f32 %v425, 0.625
        %903 = vset.pattern.permute.xlu0 0
        %904 = vperm.xlu0 %903, %v898
        %v905 = vpop.permute.xlu0 %904
        %908 = vset.pattern.permute.xlu0 0
        %909 = vperm.xlu0 %908, %v899
        %v910 = vpop.permute.xlu0 %909
        %913 = vset.pattern.permute.xlu0 0
        %914 = vperm.xlu0 %913, %v900
        %v915 = vpop.permute.xlu0 %914
        %918 = vset.pattern.permute.xlu0 0
        %919 = vperm.xlu0 %918, %v901
        %v920 = vpop.permute.xlu0 %919
        %v922 = vadd.f32 %v887, %v905
        %v923 = vadd.f32 %v890, %v910
        %v924 = vadd.f32 %v893, %v915
        %v925 = vadd.f32 %v896, %v920
        %v926 = vtanh.pop %v922
        %v927 = vtanh.pop %v923
        %v928 = vtanh.pop %v924
        %v929 = vtanh.pop %v925
        %v930 = vmul.f32 %v926, %v583
        %v931 = vmul.f32 %v927, %v583
        %v932 = vmul.f32 %v928, %v583
        %v933 = vmul.f32 %v929, %v583
        %v934 = vadd.f32 %v865, %v930
        %v935 = vadd.f32 %v866, %v931
        %v936 = vadd.f32 %v867, %v932
        %v937 = vadd.f32 %v868, %v933
        %938 = vmatpush.msra.mxu0 0.0
        %939 = vmatpush.msra.mxu0 0.0
        %940 = vmatpush.msra.mxu0 0.0
        %941 = vmatpush.msra.mxu0 0.0
        %942 = vmatpush.msra.mxu0 0.0
        %943 = vmatpush.msra.mxu0 0.0
        %944 = vmatpush.msra.mxu0 0.0
        %945 = vmatpush.msra.mxu0 0.0
        %946 = vmatpush.msra.mxu0 0.0
        %947 = vmatpush.msra.mxu0 0.0
        %948 = vmatpush.msra.mxu0 0.0
        %949 = vmatpush.msra.mxu0 0.0
        %950 = vmatpush.msra.mxu0 %v937
        %951 = vmatpush.msra.mxu0 %v936
        %952 = vmatpush.msra.mxu0 %v935
        %953 = vmatpush.msra.mxu0 %v934
        %954 = vmatmul.f32.gmra.mxu0 %v509
        %v955 = vpop.f32.mrf.mxu0
        %v956 = vadd.f32 %v493, %v955
        %957 = vmatmul.f32.gmra.mxu0 %v512
        %v958 = vpop.f32.mrf.mxu0
        %v959 = vadd.f32 %v496, %v958
        %960 = vmatmul.f32.gmra.mxu0 %v515
        %v961 = vpop.f32.mrf.mxu0
        %v962 = vadd.f32 %v499, %v961
        %963 = vmatmul.f32.gmra.mxu0 %v518
        %v964 = vpop.f32.mrf.mxu0
        %v965 = vadd.f32 %v502, %v964
        %966 = vdwg.mxu0
        %v967 = vmul.f32 %v422, 0.75
        %v968 = vmul.f32 %v423, 0.75
        %v969 = vmul.f32 %v424, 0.75
        %v970 = vmul.f32 %v425, 0.75
        %972 = vset.pattern.permute.xlu0 0
        %973 = vperm.xlu0 %972, %v967
        %v974 = vpop.permute.xlu0 %973
        %977 = vset.pattern.permute.xlu0 0
        %978 = vperm.xlu0 %977, %v968
        %v979 = vpop.permute.xlu0 %978
        %982 = vset.pattern.permute.xlu0 0
        %983 = vperm.xlu0 %982, %v969
        %v984 = vpop.permute.xlu0 %983
        %987 = vset.pattern.permute.xlu0 0
        %988 = vperm.xlu0 %987, %v970
        %v989 = vpop.permute.xlu0 %988
        %v991 = vadd.f32 %v956, %v974
        %v992 = vadd.f32 %v959, %v979
        %v993 = vadd.f32 %v962, %v984
        %v994 = vadd.f32 %v965, %v989
        %v995 = vtanh.pop %v991
        %v996 = vtanh.pop %v992
        %v997 = vtanh.pop %v993
        %v998 = vtanh.pop %v994
        %v999 = vmul.f32 %v995, %v583
        %v1000 = vmul.f32 %v996, %v583
        %v1001 = vmul.f32 %v997, %v583
        %v1002 = vmul.f32 %v998, %v583
        %v1003 = vadd.f32 %v934, %v999
        %v1004 = vadd.f32 %v935, %v1000
        %v1005 = vadd.f32 %v936, %v1001
        %v1006 = vadd.f32 %v937, %v1002
        %1007 = vmatpush.msra.mxu0 0.0
        %1008 = vmatpush.msra.mxu0 0.0
        %1009 = vmatpush.msra.mxu0 0.0
        %1010 = vmatpush.msra.mxu0 0.0
        %1011 = vmatpush.msra.mxu0 0.0
        %1012 = vmatpush.msra.mxu0 0.0
        %1013 = vmatpush.msra.mxu0 0.0
        %1014 = vmatpush.msra.mxu0 0.0
        %1015 = vmatpush.msra.mxu0 0.0
        %1016 = vmatpush.msra.mxu0 0.0
        %1017 = vmatpush.msra.mxu0 0.0
        %1018 = vmatpush.msra.mxu0 0.0
        %1019 = vmatpush.msra.mxu0 %v1006
        %1020 = vmatpush.msra.mxu0 %v1005
        %1021 = vmatpush.msra.mxu0 %v1004
        %1022 = vmatpush.msra.mxu0 %v1003
        %1023 = vmatmul.f32.gmra.mxu0 %v509
        %v1024 = vpop.f32.mrf.mxu0
        %v1025 = vadd.f32 %v493, %v1024
        %1026 = vmatmul.f32.gmra.mxu0 %v512
        %v1027 = vpop.f32.mrf.mxu0
        %v1028 = vadd.f32 %v496, %v1027
        %1029 = vmatmul.f32.gmra.mxu0 %v515
        %v1030 = vpop.f32.mrf.mxu0
        %v1031 = vadd.f32 %v499, %v1030
        %1032 = vmatmul.f32.gmra.mxu0 %v518
        %v1033 = vpop.f32.mrf.mxu0
        %v1034 = vadd.f32 %v502, %v1033
        %1035 = vdwg.mxu0
        %v1036 = vmul.f32 %v422, 0.875
        %v1037 = vmul.f32 %v423, 0.875
        %v1038 = vmul.f32 %v424, 0.875
        %v1039 = vmul.f32 %v425, 0.875
        %1041 = vset.pattern.permute.xlu0 0
        %1042 = vperm.xlu0 %1041, %v1036
        %v1043 = vpop.permute.xlu0 %1042
        %1046 = vset.pattern.permute.xlu0 0
        %1047 = vperm.xlu0 %1046, %v1037
        %v1048 = vpop.permute.xlu0 %1047
        %1051 = vset.pattern.permute.xlu0 0
        %1052 = vperm.xlu0 %1051, %v1038
        %v1053 = vpop.permute.xlu0 %1052
        %1056 = vset.pattern.permute.xlu0 0
        %1057 = vperm.xlu0 %1056, %v1039
        %v1058 = vpop.permute.xlu0 %1057
        %v1060 = vadd.f32 %v1025, %v1043
        %v1061 = vadd.f32 %v1028, %v1048
        %v1062 = vadd.f32 %v1031, %v1053
        %v1063 = vadd.f32 %v1034, %v1058
        %v1064 = vtanh.pop %v1060
        %v1065 = vtanh.pop %v1061
        %v1066 = vtanh.pop %v1062
        %v1067 = vtanh.pop %v1063
        %v1068 = vmul.f32 %v1064, %v583
        %v1069 = vmul.f32 %v1065, %v583
        %v1070 = vmul.f32 %v1066, %v583
        %v1071 = vmul.f32 %v1067, %v583
        %v1072 = vadd.f32 %v1003, %v1068
        %v1073 = vadd.f32 %v1004, %v1069
        %v1074 = vadd.f32 %v1005, %v1070
        %v1075 = vadd.f32 %v1006, %v1071
        %1076 = vst [vmem:[%s407] sm:$0xff] %v1072
        %1077 = vst [vmem:[%s407 + $0x8] sm:$0xff] %v1073
        %1078 = vst [vmem:[%s407 + $0x10] sm:$0xff] %v1074
        %1079 = vst [vmem:[%s407 + $0x18] sm:$0xff] %v1075
        %s1080 = sand.u32 %s222, 1
        %s1081 = scalar_lea.sflag [#allocation4], %s1080
        %s1082 = sand.u32 %s222, 1
        %s1083 = smul.addr %s1082, 32
        %s1084 = scalar_lea.vmem [#allocation8], %s1083
        // Predicated region
        $region61: #{tpu_custom_call.1} parent=47 // pred_check
          %p1085 = pneg %p232
        $region62: #{tpu_custom_call.1} parent=47 // pred_check_branch
          %1087 = sbr.rel (%p1085) target = $region64
        $region63: #{tpu_custom_call.1} parent=47 // pred_region
          %1089 = vsyncadd %s1081, 0
          %s1090 = smul.addr %s31, 4
          %s1091 = sadd.s32 %s32, %s1090
          %s1092 = smul.addr %s1091, 8
          %s1093 = scalar_lea.hbm %s7, %s1092
          %s1094 = sshll.u32 %s1084, 4
          %s1095 = int_to_ptr.vmem [resolvable:$true] %s1094
          %s1096 = sshll.u32 %s1093, 4
          %s1097 = int_to_ptr.hbm [resolvable:$true] %s1096
          %1102 = dma.vmem_to_hbm [thread:$0]  %s1095, 512, %s1097, %s1081, 128, 128, 8
        $region64: #{tpu_custom_call.1} parent=47 // pred_fallthru
          _
      $region48: #{tpu_custom_call.1} parent=5 // pred_fallthru
        _
      %p1103 = scmp.le.s32.totalorder 2, %s22
      // Predicated region
      $region65: #{tpu_custom_call.1} parent=5 // pred_check
        %p1104 = pneg %p1103
      $region66: #{tpu_custom_call.1} parent=5 // pred_check_branch
        %1106 = sbr.rel (%p1104) target = $region68
      $region67: #{tpu_custom_call.1} parent=5 // pred_region
        %s1107 = ssub.s32 %s22, 2
        // Predicated region
        $region69: #{tpu_custom_call.1} parent=67 // pred_check
          %p1108 = pneg %p238
        $region70: #{tpu_custom_call.1} parent=67 // pred_check_branch
          %1110 = sbr.rel (%p1108) target = $region72
        $region71: #{tpu_custom_call.1} parent=67 // pred_region
          %s1111 = sand.u32 %s223, 1
          %s1112 = scalar_lea.sflag [#allocation4], %s1111
          %s1113 = sand.u32 %s223, 1
          %s1114 = smul.addr %s1113, 32
          %s1115 = scalar_lea.vmem [#allocation8], %s1114
          %1117 = dma.done %s1112, 512
        $region72: #{tpu_custom_call.1} parent=67 // pred_fallthru
          _
      $region68: #{tpu_custom_call.1} parent=5 // pred_fallthru
        _
    $region6: #{tpu_custom_call.1} parent=1 // loop_footer
      %s26 = sadd.s32 1, %s22
    $region7: #{tpu_custom_call.1} parent=1 // loop_footer_branch
      %21 = sbr.rel target = $region3
    $region8: #{tpu_custom_call.1} parent=1 // loop_exit
      _
    %1118 = vsyncpa [#allocation3], 1
    %s1119 = scalar_lea.sflag [#allocation3], 1
    %1120 = vsyncpa %s1119, 1
    %1121 = vsyncpa [#allocation6], 1
    %s1122 = scalar_lea.sflag [#allocation6], 1
    %1123 = vsyncpa %s1122, 1
    %1124 = vsyncpa [#allocation4], 1
    %s1125 = scalar_lea.sflag [#allocation4], 1
    %1126 = vsyncpa %s1125, 1

</llo_original>
